<compile_context>
chip_gen: v7x
topology: tpu7x:2x2x1
jax: 0.10.0
libtpu: 0.0.40
codegen_flags: <defaults>
</compile_context>

<pallas_src>
import jax
import jax.numpy as jnp
from jax.experimental import pallas as pl
from jax.experimental.pallas import tpu as pltpu

LANES = 128                    # TPU lane width
SAMPLE_LANES = 8               # lanes per packed sample (widest layer is 8)
PACK = LANES // SAMPLE_LANES   # 16 samples per 128-lane row
MAX_TB = 1024                  # max packed rows per grid step (= 16384 samples)

# (in, out) sizes of the 6 Linear layers, in forward order.
LAYER_DIMS = [(4, 8), (8, 4), (4, 2), (2, 4), (4, 8), (8, 4)]
NUM_LAYERS = len(LAYER_DIMS)


def _ae_kernel(x_ref, w_ref, b_ref, o_ref):
    """Fused 6x (block-diag matmul + bias + ReLU) chain on one batch-row tile.

    x_ref: (TB, 128)     packed activations, 16 samples per row
    w_ref: (6, 128, 128) block-diagonal weights (16 copies of each 8x8 block)
    b_ref: (6, 1, 128)   biases tiled 16x across the lanes
    o_ref: (TB, 128)     packed outputs (only 4 lanes per sample meaningful)
    """
    h = x_ref[...]
    for layer in range(NUM_LAYERS):              # static unroll: 6 MXU matmuls
        h = jnp.dot(h, w_ref[layer], preferred_element_type=jnp.float32)
        h = jnp.maximum(h + b_ref[layer], 0.0)   # (TB,128) + (1,128) broadcast
    o_ref[...] = h.astype(o_ref.dtype)


def init_raw_params(key):
    """PyTorch-style init: U(-1/sqrt(fan_in), +1/sqrt(fan_in)).

    Returns a list of (w, b) with w stored (in, out)."""
    params = []
    for fan_in, fan_out in LAYER_DIMS:
        key, kw, kb = jax.random.split(key, 3)
        bound = 1.0 / jnp.sqrt(jnp.float32(fan_in))
        w = jax.random.uniform(kw, (fan_in, fan_out), jnp.float32, -bound, bound)
        b = jax.random.uniform(kb, (fan_out,), jnp.float32, -bound, bound)
        params.append((w, b))
    return params


def pack_params(raw_params):
    """Pack raw params into the block-diagonal packed layout.

    Returns:
      w_stack: (6, 128, 128) block-diagonal weights (16 copies of 8x8 block)
      b_stack: (6, 1, 128)   biases tiled 16x across the lanes
    """
    ws, bs = [], []
    eye = jnp.eye(PACK, dtype=jnp.float32)
    for (fan_in, fan_out), (w, b) in zip(LAYER_DIMS, raw_params):
        w8 = jnp.zeros((SAMPLE_LANES, SAMPLE_LANES), jnp.float32)
        w8 = w8.at[:fan_in, :fan_out].set(w)
        b8 = jnp.zeros((SAMPLE_LANES,), jnp.float32).at[:fan_out].set(b)
        ws.append(jnp.kron(eye, w8))              # (128,128) block-diagonal
        bs.append(jnp.tile(b8, PACK)[None, :])    # (1,128)
    return jnp.stack(ws), jnp.stack(bs)


@jax.jit
def iris_autoencoder3_forward(x, w_stack, b_stack):
    """x: (B, 4) float32 -> (B, 4) float32."""
    B = x.shape[0]

    # Packed-row geometry (all static under jit).
    rows = pl.cdiv(B, PACK)                       # packed rows needed
    rows_pad8 = pl.cdiv(rows, 8) * 8              # sublane alignment
    n_steps = pl.cdiv(rows_pad8, MAX_TB)          # grid steps
    tb = pl.cdiv(pl.cdiv(rows_pad8, n_steps), 8) * 8   # balanced batch tile
    rows_pad = n_steps * tb                       # total padded rows
    b_pad = rows_pad * PACK                       # padded sample count

    # Cheap pad (B,4)->(B_pad,8) + contiguous reshape to (rows_pad,128).
    x8 = jnp.pad(x, ((0, b_pad - B), (0, SAMPLE_LANES - x.shape[1])))
    x_rows = x8.reshape(rows_pad, LANES)

    out_rows = pl.pallas_call(
        _ae_kernel,
        out_shape=jax.ShapeDtypeStruct((rows_pad, LANES), jnp.float32),
        grid_spec=pltpu.PrefetchScalarGridSpec(
            num_scalar_prefetch=0,
            grid=(n_steps,),
            in_specs=[
                pl.BlockSpec((tb, LANES), lambda i: (i, 0)),
                pl.BlockSpec((NUM_LAYERS, LANES, LANES), lambda i: (0, 0, 0)),
                pl.BlockSpec((NUM_LAYERS, 1, LANES), lambda i: (0, 0, 0)),
            ],
            out_specs=pl.BlockSpec((tb, LANES), lambda i: (i, 0)),
        ),
        compiler_params=pltpu.CompilerParams(
            dimension_semantics=("parallel",)),
    )(x_rows, w_stack, b_stack)

    # Unpack: (rows_pad,128) -> (b_pad,8) -> (B,4). Contiguous reshape + slice.
    return out_rows.reshape(b_pad, SAMPLE_LANES)[:B, :4]


def reference_forward(x, raw_params):
    """Plain-JAX reference of the same forward pass (for sanity check)."""
    h = x
    for w, b in raw_params:
        h = jnp.maximum(h @ w + b, 0.0)
    return h


if __name__ == "__main__":
    key = jax.random.PRNGKey(0)
    kp, kx1, kx2 = jax.random.split(key, 3)

    raw_params = init_raw_params(kp)
    w_stack, b_stack = pack_params(raw_params)

    # Primary check: Iris-sized batch (150 samples, 4 features) — exercises
    # the non-multiple-of-16 padding path; collapses to a single grid step.
    x = jax.random.normal(kx1, (150, 4), jnp.float32)
    out = iris_autoencoder3_forward(x, w_stack, b_stack)
    jax.block_until_ready(out)
    ref = reference_forward(x, raw_params)
    assert out.shape == (150, 4)
    assert jnp.allclose(out, ref, atol=1e-5, rtol=1e-5)

    # Secondary check: larger batch forces a multi-step grid (validates the
    # balanced tiling and the "parallel" batch axis).
    x2 = jax.random.normal(kx2, (20000, 4), jnp.float32)
    out2 = iris_autoencoder3_forward(x2, w_stack, b_stack)
    jax.block_until_ready(out2)
    ref2 = reference_forward(x2, raw_params)
    assert out2.shape == (20000, 4)
    assert jnp.allclose(out2, ref2, atol=1e-5, rtol=1e-5)

    print("KERNEL_OK")
</pallas_src>

<mosaic_0001>
module attributes {stable_mosaic.version = 11 : i64} {
  func.func @_ae_kernel(%arg0: i32, %arg1: memref<16x128xf32, #tpu.memory_space<vmem>>, %arg2: memref<6x128x128xf32, #tpu.memory_space<vmem>>, %arg3: memref<6x1x128xf32, #tpu.memory_space<vmem>>, %arg4: memref<16x128xf32, #tpu.memory_space<vmem>>) attributes {dimension_semantics = [#tpu.dimension_semantics<parallel>], iteration_bounds = array<i64: 1>, scalar_prefetch = 0 : i64, scratch_operands = 0 : i64, tpu.core_type = #tpu.core_type<tc>, window_params = [{transform_indices = @transform_0, window_bounds = array<i64: 16, 128>}, {pipeline_mode = #tpu.pipeline_mode<synchronous>, transform_indices = @transform_1, window_bounds = array<i64: 6, 128, 128>}, {pipeline_mode = #tpu.pipeline_mode<synchronous>, transform_indices = @transform_2, window_bounds = array<i64: 6, 1, 128>}, {transform_indices = @transform_3, window_bounds = array<i64: 16, 128>}]} {
    %c0 = arith.constant 0 : index
    %c0_0 = arith.constant 0 : index
    %0 = vector.load %arg1[%c0, %c0_0] : memref<16x128xf32, #tpu.memory_space<vmem>>, vector<16x128xf32>
    %c0_1 = arith.constant 0 : index
    %c0_2 = arith.constant 0 : index
    %c0_3 = arith.constant 0 : index
    %1 = vector.load %arg2[%c0_1, %c0_2, %c0_3] : memref<6x128x128xf32, #tpu.memory_space<vmem>>, vector<1x128x128xf32>
    %2 = vector.shape_cast %1 : vector<1x128x128xf32> to vector<128x128xf32>
    %cst = arith.constant dense<0.000000e+00> : vector<16x128xf32>
    %3 = tpu.matmul %0, %2, %cst {dimension_numbers = #tpu.dot_dimension_numbers<[1], [0], [0], [1], [0, 0, 1, 1], [], []>} : vector<16x128xf32>, vector<128x128xf32>, vector<16x128xf32> -> vector<16x128xf32>
    %c0_4 = arith.constant 0 : index
    %c0_5 = arith.constant 0 : index
    %c0_6 = arith.constant 0 : index
    %4 = vector.load %arg3[%c0_4, %c0_5, %c0_6] : memref<6x1x128xf32, #tpu.memory_space<vmem>>, vector<1x1x128xf32>
    %5 = vector.shape_cast %4 : vector<1x1x128xf32> to vector<1x128xf32>
    %6 = vector.broadcast %5 : vector<1x128xf32> to vector<16x128xf32>
    %7 = arith.addf %3, %6 : vector<16x128xf32>
    %cst_7 = arith.constant 0.000000e+00 : f32
    %8 = vector.broadcast %cst_7 : f32 to vector<16x128xf32>
    %9 = arith.maximumf %7, %8 : vector<16x128xf32>
    %c1 = arith.constant 1 : index
    %c0_8 = arith.constant 0 : index
    %c0_9 = arith.constant 0 : index
    %10 = vector.load %arg2[%c1, %c0_8, %c0_9] : memref<6x128x128xf32, #tpu.memory_space<vmem>>, vector<1x128x128xf32>
    %11 = vector.shape_cast %10 : vector<1x128x128xf32> to vector<128x128xf32>
    %cst_10 = arith.constant dense<0.000000e+00> : vector<16x128xf32>
    %12 = tpu.matmul %9, %11, %cst_10 {dimension_numbers = #tpu.dot_dimension_numbers<[1], [0], [0], [1], [0, 0, 1, 1], [], []>} : vector<16x128xf32>, vector<128x128xf32>, vector<16x128xf32> -> vector<16x128xf32>
    %c1_11 = arith.constant 1 : index
    %c0_12 = arith.constant 0 : index
    %c0_13 = arith.constant 0 : index
    %13 = vector.load %arg3[%c1_11, %c0_12, %c0_13] : memref<6x1x128xf32, #tpu.memory_space<vmem>>, vector<1x1x128xf32>
    %14 = vector.shape_cast %13 : vector<1x1x128xf32> to vector<1x128xf32>
    %15 = vector.broadcast %14 : vector<1x128xf32> to vector<16x128xf32>
    %16 = arith.addf %12, %15 : vector<16x128xf32>
    %cst_14 = arith.constant 0.000000e+00 : f32
    %17 = vector.broadcast %cst_14 : f32 to vector<16x128xf32>
    %18 = arith.maximumf %16, %17 : vector<16x128xf32>
    %c2 = arith.constant 2 : index
    %c0_15 = arith.constant 0 : index
    %c0_16 = arith.constant 0 : index
    %19 = vector.load %arg2[%c2, %c0_15, %c0_16] : memref<6x128x128xf32, #tpu.memory_space<vmem>>, vector<1x128x128xf32>
    %20 = vector.shape_cast %19 : vector<1x128x128xf32> to vector<128x128xf32>
    %cst_17 = arith.constant dense<0.000000e+00> : vector<16x128xf32>
    %21 = tpu.matmul %18, %20, %cst_17 {dimension_numbers = #tpu.dot_dimension_numbers<[1], [0], [0], [1], [0, 0, 1, 1], [], []>} : vector<16x128xf32>, vector<128x128xf32>, vector<16x128xf32> -> vector<16x128xf32>
    %c2_18 = arith.constant 2 : index
    %c0_19 = arith.constant 0 : index
    %c0_20 = arith.constant 0 : index
    %22 = vector.load %arg3[%c2_18, %c0_19, %c0_20] : memref<6x1x128xf32, #tpu.memory_space<vmem>>, vector<1x1x128xf32>
    %23 = vector.shape_cast %22 : vector<1x1x128xf32> to vector<1x128xf32>
    %24 = vector.broadcast %23 : vector<1x128xf32> to vector<16x128xf32>
    %25 = arith.addf %21, %24 : vector<16x128xf32>
    %cst_21 = arith.constant 0.000000e+00 : f32
    %26 = vector.broadcast %cst_21 : f32 to vector<16x128xf32>
    %27 = arith.maximumf %25, %26 : vector<16x128xf32>
    %c3 = arith.constant 3 : index
    %c0_22 = arith.constant 0 : index
    %c0_23 = arith.constant 0 : index
    %28 = vector.load %arg2[%c3, %c0_22, %c0_23] : memref<6x128x128xf32, #tpu.memory_space<vmem>>, vector<1x128x128xf32>
    %29 = vector.shape_cast %28 : vector<1x128x128xf32> to vector<128x128xf32>
    %cst_24 = arith.constant dense<0.000000e+00> : vector<16x128xf32>
    %30 = tpu.matmul %27, %29, %cst_24 {dimension_numbers = #tpu.dot_dimension_numbers<[1], [0], [0], [1], [0, 0, 1, 1], [], []>} : vector<16x128xf32>, vector<128x128xf32>, vector<16x128xf32> -> vector<16x128xf32>
    %c3_25 = arith.constant 3 : index
    %c0_26 = arith.constant 0 : index
    %c0_27 = arith.constant 0 : index
    %31 = vector.load %arg3[%c3_25, %c0_26, %c0_27] : memref<6x1x128xf32, #tpu.memory_space<vmem>>, vector<1x1x128xf32>
    %32 = vector.shape_cast %31 : vector<1x1x128xf32> to vector<1x128xf32>
    %33 = vector.broadcast %32 : vector<1x128xf32> to vector<16x128xf32>
    %34 = arith.addf %30, %33 : vector<16x128xf32>
    %cst_28 = arith.constant 0.000000e+00 : f32
    %35 = vector.broadcast %cst_28 : f32 to vector<16x128xf32>
    %36 = arith.maximumf %34, %35 : vector<16x128xf32>
    %c4 = arith.constant 4 : index
    %c0_29 = arith.constant 0 : index
    %c0_30 = arith.constant 0 : index
    %37 = vector.load %arg2[%c4, %c0_29, %c0_30] : memref<6x128x128xf32, #tpu.memory_space<vmem>>, vector<1x128x128xf32>
    %38 = vector.shape_cast %37 : vector<1x128x128xf32> to vector<128x128xf32>
    %cst_31 = arith.constant dense<0.000000e+00> : vector<16x128xf32>
    %39 = tpu.matmul %36, %38, %cst_31 {dimension_numbers = #tpu.dot_dimension_numbers<[1], [0], [0], [1], [0, 0, 1, 1], [], []>} : vector<16x128xf32>, vector<128x128xf32>, vector<16x128xf32> -> vector<16x128xf32>
    %c4_32 = arith.constant 4 : index
    %c0_33 = arith.constant 0 : index
    %c0_34 = arith.constant 0 : index
    %40 = vector.load %arg3[%c4_32, %c0_33, %c0_34] : memref<6x1x128xf32, #tpu.memory_space<vmem>>, vector<1x1x128xf32>
    %41 = vector.shape_cast %40 : vector<1x1x128xf32> to vector<1x128xf32>
    %42 = vector.broadcast %41 : vector<1x128xf32> to vector<16x128xf32>
    %43 = arith.addf %39, %42 : vector<16x128xf32>
    %cst_35 = arith.constant 0.000000e+00 : f32
    %44 = vector.broadcast %cst_35 : f32 to vector<16x128xf32>
    %45 = arith.maximumf %43, %44 : vector<16x128xf32>
    %c5 = arith.constant 5 : index
    %c0_36 = arith.constant 0 : index
    %c0_37 = arith.constant 0 : index
    %46 = vector.load %arg2[%c5, %c0_36, %c0_37] : memref<6x128x128xf32, #tpu.memory_space<vmem>>, vector<1x128x128xf32>
    %47 = vector.shape_cast %46 : vector<1x128x128xf32> to vector<128x128xf32>
    %cst_38 = arith.constant dense<0.000000e+00> : vector<16x128xf32>
    %48 = tpu.matmul %45, %47, %cst_38 {dimension_numbers = #tpu.dot_dimension_numbers<[1], [0], [0], [1], [0, 0, 1, 1], [], []>} : vector<16x128xf32>, vector<128x128xf32>, vector<16x128xf32> -> vector<16x128xf32>
    %c5_39 = arith.constant 5 : index
    %c0_40 = arith.constant 0 : index
    %c0_41 = arith.constant 0 : index
    %49 = vector.load %arg3[%c5_39, %c0_40, %c0_41] : memref<6x1x128xf32, #tpu.memory_space<vmem>>, vector<1x1x128xf32>
    %50 = vector.shape_cast %49 : vector<1x1x128xf32> to vector<1x128xf32>
    %51 = vector.broadcast %50 : vector<1x128xf32> to vector<16x128xf32>
    %52 = arith.addf %48, %51 : vector<16x128xf32>
    %cst_42 = arith.constant 0.000000e+00 : f32
    %53 = vector.broadcast %cst_42 : f32 to vector<16x128xf32>
    %54 = arith.maximumf %52, %53 : vector<16x128xf32>
    %c0_43 = arith.constant 0 : index
    %c0_44 = arith.constant 0 : index
    %55 = vector.load %arg4[%c0_43, %c0_44] : memref<16x128xf32, #tpu.memory_space<vmem>>, vector<16x128xf32>
    tpu.vector_store %arg4[%c0_43, %c0_44], %54 {strides = array<i32>} : memref<16x128xf32, #tpu.memory_space<vmem>>, vector<16x128xf32>,
    return
  }
  func.func @transform_0(%arg0: i32) -> (i32, i32) {
    %c0_i32 = arith.constant 0 : i32
    %c0_i32_0 = arith.constant 0 : i32
    return %arg0, %c0_i32 : i32, i32
  }
  func.func @transform_1(%arg0: i32) -> (i32, i32, i32) {
    %c0_i32 = arith.constant 0 : i32
    %c0_i32_0 = arith.constant 0 : i32
    %c0_i32_1 = arith.constant 0 : i32
    %c0_i32_2 = arith.constant 0 : i32
    return %c0_i32, %c0_i32_0, %c0_i32_1 : i32, i32, i32
  }
  func.func @transform_2(%arg0: i32) -> (i32, i32, i32) {
    %c0_i32 = arith.constant 0 : i32
    %c0_i32_0 = arith.constant 0 : i32
    %c0_i32_1 = arith.constant 0 : i32
    %c0_i32_2 = arith.constant 0 : i32
    return %c0_i32, %c0_i32_0, %c0_i32_1 : i32, i32, i32
  }
  func.func @transform_3(%arg0: i32) -> (i32, i32) {
    %c0_i32 = arith.constant 0 : i32
    %c0_i32_0 = arith.constant 0 : i32
    return %arg0, %c0_i32 : i32, i32
  }
}

</mosaic_0001>

<llo_original>
// kernel: iris_autoencoder3_forward.1
$region0: #{iris_autoencoder3_forward.1}
  #allocation0 [shape = 'u32[]', space=smem, size = 0x4, offset = 0x4, fixed_abs, tag = 'smem constant byte address 0x4 - core index']
  #allocation1 [shape = 'u32[144,128]{1,0:T(1,128)}', space=vmem, size = 0x12000, scoped, tag = 'internal scratch']
  %s0 = inlined_call_operand.vmem [shape: f32[16,128], index: 0, kind: input, shape index: {}]
  %s1 = inlined_call_operand.vmem [shape: f32[6,128,128], index: 1, kind: input, shape index: {}]
  %s2 = inlined_call_operand.vmem [shape: f32[6,1,128], index: 2, kind: input, shape index: {}]
  %s3 = inlined_call_operand.vmem [shape: f32[16,128], index: 3, kind: output, shape index: {}]
  %s4 = sld [smem:[#allocation0]]
  $region22: #{iris_autoencoder3_forward.1} parent=0
    _
  %s6 = ssub.s32 1, %s4
  %s7 = scalar_select 0, %s6, %s4
  // Predicated region
  $region2: #{iris_autoencoder3_forward.1} parent=0 // pred_check
    _
  $region3: #{iris_autoencoder3_forward.1} parent=0 // pred_check_branch
    %9 = sbr.rel (0) target = $region5
  $region4: #{iris_autoencoder3_forward.1} parent=0 // pred_region
    _
  $region5: #{iris_autoencoder3_forward.1} parent=0 // pred_fallthru
    _
  // Predicated region
  $region6: #{iris_autoencoder3_forward.1} parent=0 // pred_check
    _
  $region7: #{iris_autoencoder3_forward.1} parent=0 // pred_check_branch
    %11 = sbr.rel (0) target = $region9
  $region8: #{iris_autoencoder3_forward.1} parent=0 // pred_region
    _
  $region9: #{iris_autoencoder3_forward.1} parent=0 // pred_fallthru
    _
  // Predicated region
  $region10: #{iris_autoencoder3_forward.1} parent=0 // pred_check
    _
  $region11: #{iris_autoencoder3_forward.1} parent=0 // pred_check_branch
    %13 = sbr.rel (0) target = $region13
  $region12: #{iris_autoencoder3_forward.1} parent=0 // pred_region
    _
  $region13: #{iris_autoencoder3_forward.1} parent=0 // pred_fallthru
    _
  %v14 = vld [vmem:[%s0] sm:$0xff]
  %v15 = vld [vmem:[%s0 + $0x8] sm:$0xff]
  %v16 = vld [vmem:[%s1] sm:$0xff]
  %v17 = vld [vmem:[%s1 + $0x8] sm:$0xff]
  %v18 = vld [vmem:[%s1 + $0x10] sm:$0xff]
  %v19 = vld [vmem:[%s1 + $0x18] sm:$0xff]
  %v20 = vld [vmem:[%s1 + $0x20] sm:$0xff]
  %v21 = vld [vmem:[%s1 + $0x28] sm:$0xff]
  %v22 = vld [vmem:[%s1 + $0x30] sm:$0xff]
  %v23 = vld [vmem:[%s1 + $0x38] sm:$0xff]
  %v24 = vld [vmem:[%s1 + $0x40] sm:$0xff]
  %v25 = vld [vmem:[%s1 + $0x48] sm:$0xff]
  %v26 = vld [vmem:[%s1 + $0x50] sm:$0xff]
  %v27 = vld [vmem:[%s1 + $0x58] sm:$0xff]
  %v28 = vld [vmem:[%s1 + $0x60] sm:$0xff]
  %v29 = vld [vmem:[%s1 + $0x68] sm:$0xff]
  %v30 = vld [vmem:[%s1 + $0x70] sm:$0xff]
  %v31 = vld [vmem:[%s1 + $0x78] sm:$0xff]
  %v32 = vld [vmem:[%s2] sm:$0x1]
  %v34 = vlaneseq
  %v35 = vshrl.u32 %v34, 7
  %v36 = vsub.s32 0, %v35
  %v37 = vrot.slane %v32, %v36
  %39 = vmatprep.subr.mxu0 0.0
  %40 = vmatpush1.msra.mxu0 %v16
  %41 = vmatprep.subr.mxu0 0.0
  %42 = vmatpush1.msra.mxu0 %v17
  %43 = vmatprep.subr.mxu0 0.0
  %44 = vmatpush1.msra.mxu0 %v18
  %45 = vmatprep.subr.mxu0 0.0
  %46 = vmatpush1.msra.mxu0 %v19
  %47 = vmatprep.subr.mxu0 0.0
  %48 = vmatpush1.msra.mxu0 %v20
  %49 = vmatprep.subr.mxu0 0.0
  %50 = vmatpush1.msra.mxu0 %v21
  %51 = vmatprep.subr.mxu0 0.0
  %52 = vmatpush1.msra.mxu0 %v22
  %53 = vmatprep.subr.mxu0 0.0
  %54 = vmatpush1.msra.mxu0 %v23
  %55 = vmatprep.subr.mxu0 0.0
  %56 = vmatpush1.msra.mxu0 %v24
  %57 = vmatprep.subr.mxu0 0.0
  %58 = vmatpush1.msra.mxu0 %v25
  %59 = vmatprep.subr.mxu0 0.0
  %60 = vmatpush1.msra.mxu0 %v26
  %61 = vmatprep.subr.mxu0 0.0
  %62 = vmatpush1.msra.mxu0 %v27
  %63 = vmatprep.subr.mxu0 0.0
  %64 = vmatpush1.msra.mxu0 %v28
  %65 = vmatprep.subr.mxu0 0.0
  %66 = vmatpush1.msra.mxu0 %v29
  %67 = vmatprep.subr.mxu0 0.0
  %68 = vmatpush1.msra.mxu0 %v30
  %69 = vmatprep.subr.mxu0 0.0
  %70 = vmatpush1.msra.mxu0 %v31
  %71 = vmatprep.subr.mxu0 0.0
  %72 = vmatpush1.msra.mxu0 0.0
  %73 = vmatprep.subr.mxu0 0.0
  %74 = vmatpush1.msra.mxu0 0.0
  %75 = vmatprep.subr.mxu0 0.0
  %76 = vmatpush1.msra.mxu0 0.0
  %77 = vmatprep.subr.mxu0 0.0
  %78 = vmatpush1.msra.mxu0 0.0
  %79 = vmatprep.subr.mxu0 0.0
  %80 = vmatpush1.msra.mxu0 0.0
  %81 = vmatprep.subr.mxu0 0.0
  %82 = vmatpush1.msra.mxu0 0.0
  %83 = vmatprep.subr.mxu0 0.0
  %84 = vmatpush1.msra.mxu0 0.0
  %85 = vmatprep.subr.mxu0 0.0
  %86 = vmatpush1.msra.mxu0 0.0
  %87 = vmatprep.subr.mxu0 0.0
  %88 = vmatpush1.msra.mxu0 0.0
  %89 = vmatprep.subr.mxu0 0.0
  %90 = vmatpush1.msra.mxu0 0.0
  %91 = vmatprep.subr.mxu0 0.0
  %92 = vmatpush1.msra.mxu0 0.0
  %93 = vmatprep.subr.mxu0 0.0
  %94 = vmatpush1.msra.mxu0 0.0
  %95 = vmatprep.subr.mxu0 0.0
  %96 = vmatpush1.msra.mxu0 0.0
  %97 = vmatprep.subr.mxu0 0.0
  %98 = vmatpush1.msra.mxu0 0.0
  %99 = vmatprep.subr.mxu0 0.0
  %100 = vmatpush1.msra.mxu0 0.0
  %101 = vmatprep.subr.mxu0 0.0
  %102 = vmatpush1.msra.mxu0 0.0
  %103 = vmatprep.mubr.f32.mxu0 0.0
  %104 = vmatmul.mubr.f32.gmra.mrb[0].mxu0 %v14
  %v105 = vpop.f32.mrb[0].mxu0
  %v106 = vadd.f32 %v37, %v105
  %v107 = vpop.f32.mrb[0].mxu0
  %108 = vmatprep.mubr.f32.mxu0 0.0
  %109 = vmatmul.mubr.f32.gmra.mrb[0].mxu0 %v15
  %v110 = vpop.f32.mrb[0].mxu0
  %v111 = vadd.f32 %v37, %v110
  %v112 = vpop.f32.mrb[0].mxu0
  %113 = vdwg.mxu0
  %v114 = vmax.f32 %v106, 0.0
  %v115 = vmax.f32 %v111, 0.0
  %s116 = scalar_lea.vmem %s1, 128
  %v117 = vld [vmem:[%s116] sm:$0xff]
  %v118 = vld [vmem:[%s116 + $0x8] sm:$0xff]
  %v119 = vld [vmem:[%s116 + $0x10] sm:$0xff]
  %v120 = vld [vmem:[%s116 + $0x18] sm:$0xff]
  %v121 = vld [vmem:[%s116 + $0x20] sm:$0xff]
  %v122 = vld [vmem:[%s116 + $0x28] sm:$0xff]
  %v123 = vld [vmem:[%s116 + $0x30] sm:$0xff]
  %v124 = vld [vmem:[%s116 + $0x38] sm:$0xff]
  %v125 = vld [vmem:[%s116 + $0x40] sm:$0xff]
  %v126 = vld [vmem:[%s116 + $0x48] sm:$0xff]
  %v127 = vld [vmem:[%s116 + $0x50] sm:$0xff]
  %v128 = vld [vmem:[%s116 + $0x58] sm:$0xff]
  %v129 = vld [vmem:[%s116 + $0x60] sm:$0xff]
  %v130 = vld [vmem:[%s116 + $0x68] sm:$0xff]
  %v131 = vld [vmem:[%s116 + $0x70] sm:$0xff]
  %v132 = vld [vmem:[%s116 + $0x78] sm:$0xff]
  %s133 = scalar_lea.vmem %s2, 1
  %v134 = vld [vmem:[%s133] sm:$0x1]
  %v136 = vlaneseq
  %v137 = vshrl.u32 %v136, 7
  %v138 = vsub.s32 0, %v137
  %v139 = vrot.slane %v134, %v138
  %141 = vmatprep.subr.mxu0 0.0
  %142 = vmatpush1.msra.mxu0 %v117
  %143 = vmatprep.subr.mxu0 0.0
  %144 = vmatpush1.msra.mxu0 %v118
  %145 = vmatprep.subr.mxu0 0.0
  %146 = vmatpush1.msra.mxu0 %v119
  %147 = vmatprep.subr.mxu0 0.0
  %148 = vmatpush1.msra.mxu0 %v120
  %149 = vmatprep.subr.mxu0 0.0
  %150 = vmatpush1.msra.mxu0 %v121
  %151 = vmatprep.subr.mxu0 0.0
  %152 = vmatpush1.msra.mxu0 %v122
  %153 = vmatprep.subr.mxu0 0.0
  %154 = vmatpush1.msra.mxu0 %v123
  %155 = vmatprep.subr.mxu0 0.0
  %156 = vmatpush1.msra.mxu0 %v124
  %157 = vmatprep.subr.mxu0 0.0
  %158 = vmatpush1.msra.mxu0 %v125
  %159 = vmatprep.subr.mxu0 0.0
  %160 = vmatpush1.msra.mxu0 %v126
  %161 = vmatprep.subr.mxu0 0.0
  %162 = vmatpush1.msra.mxu0 %v127
  %163 = vmatprep.subr.mxu0 0.0
  %164 = vmatpush1.msra.mxu0 %v128
  %165 = vmatprep.subr.mxu0 0.0
  %166 = vmatpush1.msra.mxu0 %v129
  %167 = vmatprep.subr.mxu0 0.0
  %168 = vmatpush1.msra.mxu0 %v130
  %169 = vmatprep.subr.mxu0 0.0
  %170 = vmatpush1.msra.mxu0 %v131
  %171 = vmatprep.subr.mxu0 0.0
  %172 = vmatpush1.msra.mxu0 %v132
  %173 = vmatprep.subr.mxu0 0.0
  %174 = vmatpush1.msra.mxu0 0.0
  %175 = vmatprep.subr.mxu0 0.0
  %176 = vmatpush1.msra.mxu0 0.0
  %177 = vmatprep.subr.mxu0 0.0
  %178 = vmatpush1.msra.mxu0 0.0
  %179 = vmatprep.subr.mxu0 0.0
  %180 = vmatpush1.msra.mxu0 0.0
  %181 = vmatprep.subr.mxu0 0.0
  %182 = vmatpush1.msra.mxu0 0.0
  %183 = vmatprep.subr.mxu0 0.0
  %184 = vmatpush1.msra.mxu0 0.0
  %185 = vmatprep.subr.mxu0 0.0
  %186 = vmatpush1.msra.mxu0 0.0
  %187 = vmatprep.subr.mxu0 0.0
  %188 = vmatpush1.msra.mxu0 0.0
  %189 = vmatprep.subr.mxu0 0.0
  %190 = vmatpush1.msra.mxu0 0.0
  %191 = vmatprep.subr.mxu0 0.0
  %192 = vmatpush1.msra.mxu0 0.0
  %193 = vmatprep.subr.mxu0 0.0
  %194 = vmatpush1.msra.mxu0 0.0
  %195 = vmatprep.subr.mxu0 0.0
  %196 = vmatpush1.msra.mxu0 0.0
  %197 = vmatprep.subr.mxu0 0.0
  %198 = vmatpush1.msra.mxu0 0.0
  %199 = vmatprep.subr.mxu0 0.0
  %200 = vmatpush1.msra.mxu0 0.0
  %201 = vmatprep.subr.mxu0 0.0
  %202 = vmatpush1.msra.mxu0 0.0
  %203 = vmatprep.subr.mxu0 0.0
  %204 = vmatpush1.msra.mxu0 0.0
  %205 = vmatprep.mubr.f32.mxu0 0.0
  %206 = vmatmul.mubr.f32.gmra.mrb[0].mxu0 %v114
  %v207 = vpop.f32.mrb[0].mxu0
  %v208 = vadd.f32 %v139, %v207
  %v209 = vpop.f32.mrb[0].mxu0
  %210 = vmatprep.mubr.f32.mxu0 0.0
  %211 = vmatmul.mubr.f32.gmra.mrb[0].mxu0 %v115
  %v212 = vpop.f32.mrb[0].mxu0
  %v213 = vadd.f32 %v139, %v212
  %v214 = vpop.f32.mrb[0].mxu0
  %215 = vdwg.mxu0
  %v216 = vmax.f32 %v208, 0.0
  %v217 = vmax.f32 %v213, 0.0
  %s218 = scalar_lea.vmem %s1, 256
  %v219 = vld [vmem:[%s218] sm:$0xff]
  %v220 = vld [vmem:[%s218 + $0x8] sm:$0xff]
  %v221 = vld [vmem:[%s218 + $0x10] sm:$0xff]
  %v222 = vld [vmem:[%s218 + $0x18] sm:$0xff]
  %v223 = vld [vmem:[%s218 + $0x20] sm:$0xff]
  %v224 = vld [vmem:[%s218 + $0x28] sm:$0xff]
  %v225 = vld [vmem:[%s218 + $0x30] sm:$0xff]
  %v226 = vld [vmem:[%s218 + $0x38] sm:$0xff]
  %v227 = vld [vmem:[%s218 + $0x40] sm:$0xff]
  %v228 = vld [vmem:[%s218 + $0x48] sm:$0xff]
  %v229 = vld [vmem:[%s218 + $0x50] sm:$0xff]
  %v230 = vld [vmem:[%s218 + $0x58] sm:$0xff]
  %v231 = vld [vmem:[%s218 + $0x60] sm:$0xff]
  %v232 = vld [vmem:[%s218 + $0x68] sm:$0xff]
  %v233 = vld [vmem:[%s218 + $0x70] sm:$0xff]
  %v234 = vld [vmem:[%s218 + $0x78] sm:$0xff]
  %s235 = scalar_lea.vmem %s2, 2
  %v236 = vld [vmem:[%s235] sm:$0x1]
  %v238 = vlaneseq
  %v239 = vshrl.u32 %v238, 7
  %v240 = vsub.s32 0, %v239
  %v241 = vrot.slane %v236, %v240
  %243 = vmatprep.subr.mxu0 0.0
  %244 = vmatpush1.msra.mxu0 %v219
  %245 = vmatprep.subr.mxu0 0.0
  %246 = vmatpush1.msra.mxu0 %v220
  %247 = vmatprep.subr.mxu0 0.0
  %248 = vmatpush1.msra.mxu0 %v221
  %249 = vmatprep.subr.mxu0 0.0
  %250 = vmatpush1.msra.mxu0 %v222
  %251 = vmatprep.subr.mxu0 0.0
  %252 = vmatpush1.msra.mxu0 %v223
  %253 = vmatprep.subr.mxu0 0.0
  %254 = vmatpush1.msra.mxu0 %v224
  %255 = vmatprep.subr.mxu0 0.0
  %256 = vmatpush1.msra.mxu0 %v225
  %257 = vmatprep.subr.mxu0 0.0
  %258 = vmatpush1.msra.mxu0 %v226
  %259 = vmatprep.subr.mxu0 0.0
  %260 = vmatpush1.msra.mxu0 %v227
  %261 = vmatprep.subr.mxu0 0.0
  %262 = vmatpush1.msra.mxu0 %v228
  %263 = vmatprep.subr.mxu0 0.0
  %264 = vmatpush1.msra.mxu0 %v229
  %265 = vmatprep.subr.mxu0 0.0
  %266 = vmatpush1.msra.mxu0 %v230
  %267 = vmatprep.subr.mxu0 0.0
  %268 = vmatpush1.msra.mxu0 %v231
  %269 = vmatprep.subr.mxu0 0.0
  %270 = vmatpush1.msra.mxu0 %v232
  %271 = vmatprep.subr.mxu0 0.0
  %272 = vmatpush1.msra.mxu0 %v233
  %273 = vmatprep.subr.mxu0 0.0
  %274 = vmatpush1.msra.mxu0 %v234
  %275 = vmatprep.subr.mxu0 0.0
  %276 = vmatpush1.msra.mxu0 0.0
  %277 = vmatprep.subr.mxu0 0.0
  %278 = vmatpush1.msra.mxu0 0.0
  %279 = vmatprep.subr.mxu0 0.0
  %280 = vmatpush1.msra.mxu0 0.0
  %281 = vmatprep.subr.mxu0 0.0
  %282 = vmatpush1.msra.mxu0 0.0
  %283 = vmatprep.subr.mxu0 0.0
  %284 = vmatpush1.msra.mxu0 0.0
  %285 = vmatprep.subr.mxu0 0.0
  %286 = vmatpush1.msra.mxu0 0.0
  %287 = vmatprep.subr.mxu0 0.0
  %288 = vmatpush1.msra.mxu0 0.0
  %289 = vmatprep.subr.mxu0 0.0
  %290 = vmatpush1.msra.mxu0 0.0
  %291 = vmatprep.subr.mxu0 0.0
  %292 = vmatpush1.msra.mxu0 0.0
  %293 = vmatprep.subr.mxu0 0.0
  %294 = vmatpush1.msra.mxu0 0.0
  %295 = vmatprep.subr.mxu0 0.0
  %296 = vmatpush1.msra.mxu0 0.0
  %297 = vmatprep.subr.mxu0 0.0
  %298 = vmatpush1.msra.mxu0 0.0
  %299 = vmatprep.subr.mxu0 0.0
  %300 = vmatpush1.msra.mxu0 0.0
  %301 = vmatprep.subr.mxu0 0.0
  %302 = vmatpush1.msra.mxu0 0.0
  %303 = vmatprep.subr.mxu0 0.0
  %304 = vmatpush1.msra.mxu0 0.0
  %305 = vmatprep.subr.mxu0 0.0
  %306 = vmatpush1.msra.mxu0 0.0
  %307 = vmatprep.mubr.f32.mxu0 0.0
  %308 = vmatmul.mubr.f32.gmra.mrb[0].mxu0 %v216
  %v309 = vpop.f32.mrb[0].mxu0
  %v310 = vadd.f32 %v241, %v309
  %v311 = vpop.f32.mrb[0].mxu0
  %312 = vmatprep.mubr.f32.mxu0 0.0
  %313 = vmatmul.mubr.f32.gmra.mrb[0].mxu0 %v217
  %v314 = vpop.f32.mrb[0].mxu0
  %v315 = vadd.f32 %v241, %v314
  %v316 = vpop.f32.mrb[0].mxu0
  %317 = vdwg.mxu0
  %v318 = vmax.f32 %v310, 0.0
  %v319 = vmax.f32 %v315, 0.0
  %s320 = scalar_lea.vmem %s1, 384
  %v321 = vld [vmem:[%s320] sm:$0xff]
  %v322 = vld [vmem:[%s320 + $0x8] sm:$0xff]
  %v323 = vld [vmem:[%s320 + $0x10] sm:$0xff]
  %v324 = vld [vmem:[%s320 + $0x18] sm:$0xff]
  %v325 = vld [vmem:[%s320 + $0x20] sm:$0xff]
  %v326 = vld [vmem:[%s320 + $0x28] sm:$0xff]
  %v327 = vld [vmem:[%s320 + $0x30] sm:$0xff]
  %v328 = vld [vmem:[%s320 + $0x38] sm:$0xff]
  %v329 = vld [vmem:[%s320 + $0x40] sm:$0xff]
  %v330 = vld [vmem:[%s320 + $0x48] sm:$0xff]
  %v331 = vld [vmem:[%s320 + $0x50] sm:$0xff]
  %v332 = vld [vmem:[%s320 + $0x58] sm:$0xff]
  %v333 = vld [vmem:[%s320 + $0x60] sm:$0xff]
  %v334 = vld [vmem:[%s320 + $0x68] sm:$0xff]
  %v335 = vld [vmem:[%s320 + $0x70] sm:$0xff]
  %v336 = vld [vmem:[%s320 + $0x78] sm:$0xff]
  %s337 = scalar_lea.vmem %s2, 3
  %v338 = vld [vmem:[%s337] sm:$0x1]
  %v340 = vlaneseq
  %v341 = vshrl.u32 %v340, 7
  %v342 = vsub.s32 0, %v341
  %v343 = vrot.slane %v338, %v342
  %345 = vmatprep.subr.mxu0 0.0
  %346 = vmatpush1.msra.mxu0 %v321
  %347 = vmatprep.subr.mxu0 0.0
  %348 = vmatpush1.msra.mxu0 %v322
  %349 = vmatprep.subr.mxu0 0.0
  %350 = vmatpush1.msra.mxu0 %v323
  %351 = vmatprep.subr.mxu0 0.0
  %352 = vmatpush1.msra.mxu0 %v324
  %353 = vmatprep.subr.mxu0 0.0
  %354 = vmatpush1.msra.mxu0 %v325
  %355 = vmatprep.subr.mxu0 0.0
  %356 = vmatpush1.msra.mxu0 %v326
  %357 = vmatprep.subr.mxu0 0.0
  %358 = vmatpush1.msra.mxu0 %v327
  %359 = vmatprep.subr.mxu0 0.0
  %360 = vmatpush1.msra.mxu0 %v328
  %361 = vmatprep.subr.mxu0 0.0
  %362 = vmatpush1.msra.mxu0 %v329
  %363 = vmatprep.subr.mxu0 0.0
  %364 = vmatpush1.msra.mxu0 %v330
  %365 = vmatprep.subr.mxu0 0.0
  %366 = vmatpush1.msra.mxu0 %v331
  %367 = vmatprep.subr.mxu0 0.0
  %368 = vmatpush1.msra.mxu0 %v332
  %369 = vmatprep.subr.mxu0 0.0
  %370 = vmatpush1.msra.mxu0 %v333
  %371 = vmatprep.subr.mxu0 0.0
  %372 = vmatpush1.msra.mxu0 %v334
  %373 = vmatprep.subr.mxu0 0.0
  %374 = vmatpush1.msra.mxu0 %v335
  %375 = vmatprep.subr.mxu0 0.0
  %376 = vmatpush1.msra.mxu0 %v336
  %377 = vmatprep.subr.mxu0 0.0
  %378 = vmatpush1.msra.mxu0 0.0
  %379 = vmatprep.subr.mxu0 0.0
  %380 = vmatpush1.msra.mxu0 0.0
  %381 = vmatprep.subr.mxu0 0.0
  %382 = vmatpush1.msra.mxu0 0.0
  %383 = vmatprep.subr.mxu0 0.0
  %384 = vmatpush1.msra.mxu0 0.0
  %385 = vmatprep.subr.mxu0 0.0
  %386 = vmatpush1.msra.mxu0 0.0
  %387 = vmatprep.subr.mxu0 0.0
  %388 = vmatpush1.msra.mxu0 0.0
  %389 = vmatprep.subr.mxu0 0.0
  %390 = vmatpush1.msra.mxu0 0.0
  %391 = vmatprep.subr.mxu0 0.0
  %392 = vmatpush1.msra.mxu0 0.0
  %393 = vmatprep.subr.mxu0 0.0
  %394 = vmatpush1.msra.mxu0 0.0
  %395 = vmatprep.subr.mxu0 0.0
  %396 = vmatpush1.msra.mxu0 0.0
  %397 = vmatprep.subr.mxu0 0.0
  %398 = vmatpush1.msra.mxu0 0.0
  %399 = vmatprep.subr.mxu0 0.0
  %400 = vmatpush1.msra.mxu0 0.0
  %401 = vmatprep.subr.mxu0 0.0
  %402 = vmatpush1.msra.mxu0 0.0
  %403 = vmatprep.subr.mxu0 0.0
  %404 = vmatpush1.msra.mxu0 0.0
  %405 = vmatprep.subr.mxu0 0.0
  %406 = vmatpush1.msra.mxu0 0.0
  %407 = vmatprep.subr.mxu0 0.0
  %408 = vmatpush1.msra.mxu0 0.0
  %409 = vmatprep.mubr.f32.mxu0 0.0
  %410 = vmatmul.mubr.f32.gmra.mrb[0].mxu0 %v318
  %v411 = vpop.f32.mrb[0].mxu0
  %v412 = vadd.f32 %v343, %v411
  %v413 = vpop.f32.mrb[0].mxu0
  %414 = vmatprep.mubr.f32.mxu0 0.0
  %415 = vmatmul.mubr.f32.gmra.mrb[0].mxu0 %v319
  %v416 = vpop.f32.mrb[0].mxu0
  %v417 = vadd.f32 %v343, %v416
  %v418 = vpop.f32.mrb[0].mxu0
  %419 = vdwg.mxu0
  %v420 = vmax.f32 %v412, 0.0
  %v421 = vmax.f32 %v417, 0.0
  %s422 = scalar_lea.vmem %s1, 512
  %v423 = vld [vmem:[%s422] sm:$0xff]
  %v424 = vld [vmem:[%s422 + $0x8] sm:$0xff]
  %v425 = vld [vmem:[%s422 + $0x10] sm:$0xff]
  %v426 = vld [vmem:[%s422 + $0x18] sm:$0xff]
  %v427 = vld [vmem:[%s422 + $0x20] sm:$0xff]
  %v428 = vld [vmem:[%s422 + $0x28] sm:$0xff]
  %v429 = vld [vmem:[%s422 + $0x30] sm:$0xff]
  %v430 = vld [vmem:[%s422 + $0x38] sm:$0xff]
  %v431 = vld [vmem:[%s422 + $0x40] sm:$0xff]
  %v432 = vld [vmem:[%s422 + $0x48] sm:$0xff]
  %v433 = vld [vmem:[%s422 + $0x50] sm:$0xff]
  %v434 = vld [vmem:[%s422 + $0x58] sm:$0xff]
  %v435 = vld [vmem:[%s422 + $0x60] sm:$0xff]
  %v436 = vld [vmem:[%s422 + $0x68] sm:$0xff]
  %v437 = vld [vmem:[%s422 + $0x70] sm:$0xff]
  %v438 = vld [vmem:[%s422 + $0x78] sm:$0xff]
  %s439 = scalar_lea.vmem %s2, 4
  %v440 = vld [vmem:[%s439] sm:$0x1]
  %v442 = vlaneseq
  %v443 = vshrl.u32 %v442, 7
  %v444 = vsub.s32 0, %v443
  %v445 = vrot.slane %v440, %v444
  %447 = vmatprep.subr.mxu0 0.0
  %448 = vmatpush1.msra.mxu0 %v423
  %449 = vmatprep.subr.mxu0 0.0
  %450 = vmatpush1.msra.mxu0 %v424
  %451 = vmatprep.subr.mxu0 0.0
  %452 = vmatpush1.msra.mxu0 %v425
  %453 = vmatprep.subr.mxu0 0.0
  %454 = vmatpush1.msra.mxu0 %v426
  %455 = vmatprep.subr.mxu0 0.0
  %456 = vmatpush1.msra.mxu0 %v427
  %457 = vmatprep.subr.mxu0 0.0
  %458 = vmatpush1.msra.mxu0 %v428
  %459 = vmatprep.subr.mxu0 0.0
  %460 = vmatpush1.msra.mxu0 %v429
  %461 = vmatprep.subr.mxu0 0.0
  %462 = vmatpush1.msra.mxu0 %v430
  %463 = vmatprep.subr.mxu0 0.0
  %464 = vmatpush1.msra.mxu0 %v431
  %465 = vmatprep.subr.mxu0 0.0
  %466 = vmatpush1.msra.mxu0 %v432
  %467 = vmatprep.subr.mxu0 0.0
  %468 = vmatpush1.msra.mxu0 %v433
  %469 = vmatprep.subr.mxu0 0.0
  %470 = vmatpush1.msra.mxu0 %v434
  %471 = vmatprep.subr.mxu0 0.0
  %472 = vmatpush1.msra.mxu0 %v435
  %473 = vmatprep.subr.mxu0 0.0
  %474 = vmatpush1.msra.mxu0 %v436
  %475 = vmatprep.subr.mxu0 0.0
  %476 = vmatpush1.msra.mxu0 %v437
  %477 = vmatprep.subr.mxu0 0.0
  %478 = vmatpush1.msra.mxu0 %v438
  %479 = vmatprep.subr.mxu0 0.0
  %480 = vmatpush1.msra.mxu0 0.0
  %481 = vmatprep.subr.mxu0 0.0
  %482 = vmatpush1.msra.mxu0 0.0
  %483 = vmatprep.subr.mxu0 0.0
  %484 = vmatpush1.msra.mxu0 0.0
  %485 = vmatprep.subr.mxu0 0.0
  %486 = vmatpush1.msra.mxu0 0.0
  %487 = vmatprep.subr.mxu0 0.0
  %488 = vmatpush1.msra.mxu0 0.0
  %489 = vmatprep.subr.mxu0 0.0
  %490 = vmatpush1.msra.mxu0 0.0
  %491 = vmatprep.subr.mxu0 0.0
  %492 = vmatpush1.msra.mxu0 0.0
  %493 = vmatprep.subr.mxu0 0.0
  %494 = vmatpush1.msra.mxu0 0.0
  %495 = vmatprep.subr.mxu0 0.0
  %496 = vmatpush1.msra.mxu0 0.0
  %497 = vmatprep.subr.mxu0 0.0
  %498 = vmatpush1.msra.mxu0 0.0
  %499 = vmatprep.subr.mxu0 0.0
  %500 = vmatpush1.msra.mxu0 0.0
  %501 = vmatprep.subr.mxu0 0.0
  %502 = vmatpush1.msra.mxu0 0.0
  %503 = vmatprep.subr.mxu0 0.0
  %504 = vmatpush1.msra.mxu0 0.0
  %505 = vmatprep.subr.mxu0 0.0
  %506 = vmatpush1.msra.mxu0 0.0
  %507 = vmatprep.subr.mxu0 0.0
  %508 = vmatpush1.msra.mxu0 0.0
  %509 = vmatprep.subr.mxu0 0.0
  %510 = vmatpush1.msra.mxu0 0.0
  %511 = vmatprep.mubr.f32.mxu0 0.0
  %512 = vmatmul.mubr.f32.gmra.mrb[0].mxu0 %v420
  %v513 = vpop.f32.mrb[0].mxu0
  %v514 = vadd.f32 %v445, %v513
  %v515 = vpop.f32.mrb[0].mxu0
  %516 = vmatprep.mubr.f32.mxu0 0.0
  %517 = vmatmul.mubr.f32.gmra.mrb[0].mxu0 %v421
  %v518 = vpop.f32.mrb[0].mxu0
  %v519 = vadd.f32 %v445, %v518
  %v520 = vpop.f32.mrb[0].mxu0
  %521 = vdwg.mxu0
  %v522 = vmax.f32 %v514, 0.0
  %v523 = vmax.f32 %v519, 0.0
  %s524 = scalar_lea.vmem %s1, 640
  %v525 = vld [vmem:[%s524] sm:$0xff]
  %v526 = vld [vmem:[%s524 + $0x8] sm:$0xff]
  %v527 = vld [vmem:[%s524 + $0x10] sm:$0xff]
  %v528 = vld [vmem:[%s524 + $0x18] sm:$0xff]
  %v529 = vld [vmem:[%s524 + $0x20] sm:$0xff]
  %v530 = vld [vmem:[%s524 + $0x28] sm:$0xff]
  %v531 = vld [vmem:[%s524 + $0x30] sm:$0xff]
  %v532 = vld [vmem:[%s524 + $0x38] sm:$0xff]
  %v533 = vld [vmem:[%s524 + $0x40] sm:$0xff]
  %v534 = vld [vmem:[%s524 + $0x48] sm:$0xff]
  %v535 = vld [vmem:[%s524 + $0x50] sm:$0xff]
  %v536 = vld [vmem:[%s524 + $0x58] sm:$0xff]
  %v537 = vld [vmem:[%s524 + $0x60] sm:$0xff]
  %v538 = vld [vmem:[%s524 + $0x68] sm:$0xff]
  %v539 = vld [vmem:[%s524 + $0x70] sm:$0xff]
  %v540 = vld [vmem:[%s524 + $0x78] sm:$0xff]
  %s541 = scalar_lea.vmem %s2, 5
  %v542 = vld [vmem:[%s541] sm:$0x1]
  %v544 = vlaneseq
  %v545 = vshrl.u32 %v544, 7
  %v546 = vsub.s32 0, %v545
  %v547 = vrot.slane %v542, %v546
  %549 = vmatprep.subr.mxu0 0.0
  %550 = vmatpush1.msra.mxu0 %v525
  %551 = vmatprep.subr.mxu0 0.0
  %552 = vmatpush1.msra.mxu0 %v526
  %553 = vmatprep.subr.mxu0 0.0
  %554 = vmatpush1.msra.mxu0 %v527
  %555 = vmatprep.subr.mxu0 0.0
  %556 = vmatpush1.msra.mxu0 %v528
  %557 = vmatprep.subr.mxu0 0.0
  %558 = vmatpush1.msra.mxu0 %v529
  %559 = vmatprep.subr.mxu0 0.0
  %560 = vmatpush1.msra.mxu0 %v530
  %561 = vmatprep.subr.mxu0 0.0
  %562 = vmatpush1.msra.mxu0 %v531
  %563 = vmatprep.subr.mxu0 0.0
  %564 = vmatpush1.msra.mxu0 %v532
  %565 = vmatprep.subr.mxu0 0.0
  %566 = vmatpush1.msra.mxu0 %v533
  %567 = vmatprep.subr.mxu0 0.0
  %568 = vmatpush1.msra.mxu0 %v534
  %569 = vmatprep.subr.mxu0 0.0
  %570 = vmatpush1.msra.mxu0 %v535
  %571 = vmatprep.subr.mxu0 0.0
  %572 = vmatpush1.msra.mxu0 %v536
  %573 = vmatprep.subr.mxu0 0.0
  %574 = vmatpush1.msra.mxu0 %v537
  %575 = vmatprep.subr.mxu0 0.0
  %576 = vmatpush1.msra.mxu0 %v538
  %577 = vmatprep.subr.mxu0 0.0
  %578 = vmatpush1.msra.mxu0 %v539
  %579 = vmatprep.subr.mxu0 0.0
  %580 = vmatpush1.msra.mxu0 %v540
  %581 = vmatprep.subr.mxu0 0.0
  %582 = vmatpush1.msra.mxu0 0.0
  %583 = vmatprep.subr.mxu0 0.0
  %584 = vmatpush1.msra.mxu0 0.0
  %585 = vmatprep.subr.mxu0 0.0
  %586 = vmatpush1.msra.mxu0 0.0
  %587 = vmatprep.subr.mxu0 0.0
  %588 = vmatpush1.msra.mxu0 0.0
  %589 = vmatprep.subr.mxu0 0.0
  %590 = vmatpush1.msra.mxu0 0.0
  %591 = vmatprep.subr.mxu0 0.0
  %592 = vmatpush1.msra.mxu0 0.0
  %593 = vmatprep.subr.mxu0 0.0
  %594 = vmatpush1.msra.mxu0 0.0
  %595 = vmatprep.subr.mxu0 0.0
  %596 = vmatpush1.msra.mxu0 0.0
  %597 = vmatprep.subr.mxu0 0.0
  %598 = vmatpush1.msra.mxu0 0.0
  %599 = vmatprep.subr.mxu0 0.0
  %600 = vmatpush1.msra.mxu0 0.0
  %601 = vmatprep.subr.mxu0 0.0
  %602 = vmatpush1.msra.mxu0 0.0
  %603 = vmatprep.subr.mxu0 0.0
  %604 = vmatpush1.msra.mxu0 0.0
  %605 = vmatprep.subr.mxu0 0.0
  %606 = vmatpush1.msra.mxu0 0.0
  %607 = vmatprep.subr.mxu0 0.0
  %608 = vmatpush1.msra.mxu0 0.0
  %609 = vmatprep.subr.mxu0 0.0
  %610 = vmatpush1.msra.mxu0 0.0
  %611 = vmatprep.subr.mxu0 0.0
  %612 = vmatpush1.msra.mxu0 0.0
  %613 = vmatprep.mubr.f32.mxu0 0.0
  %614 = vmatmul.mubr.f32.gmra.mrb[0].mxu0 %v522
  %v615 = vpop.f32.mrb[0].mxu0
  %v616 = vadd.f32 %v547, %v615
  %v617 = vpop.f32.mrb[0].mxu0
  %618 = vmatprep.mubr.f32.mxu0 0.0
  %619 = vmatmul.mubr.f32.gmra.mrb[0].mxu0 %v523
  %v620 = vpop.f32.mrb[0].mxu0
  %v621 = vadd.f32 %v547, %v620
  %v622 = vpop.f32.mrb[0].mxu0
  %623 = vdwg.mxu0
  %v624 = vmax.f32 %v616, 0.0
  %v625 = vmax.f32 %v621, 0.0
  %626 = vst [vmem:[%s3] sm:$0xff] %v624
  %627 = vst [vmem:[%s3 + $0x8] sm:$0xff] %v625
  // Predicated region
  $region14: #{iris_autoencoder3_forward.1} parent=0 // pred_check
    _
  $region15: #{iris_autoencoder3_forward.1} parent=0 // pred_check_branch
    %629 = sbr.rel (0) target = $region17
  $region16: #{iris_autoencoder3_forward.1} parent=0 // pred_region
    _
  $region17: #{iris_autoencoder3_forward.1} parent=0 // pred_fallthru
    _
  // Predicated region
  $region18: #{iris_autoencoder3_forward.1} parent=0 // pred_check
    _
  $region19: #{iris_autoencoder3_forward.1} parent=0 // pred_check_branch
    %631 = sbr.rel (0) target = $region21
  $region20: #{iris_autoencoder3_forward.1} parent=0 // pred_region
    _
  $region21: #{iris_autoencoder3_forward.1} parent=0 // pred_fallthru
    _

</llo_original>
